<compile_context>
chip_gen: v6e
topology: v6e:2x2x1
jax: 0.10.0
libtpu: 0.0.40
codegen_flags: <defaults>
</compile_context>

<pallas_src>
import jax
import jax.numpy as jnp
import numpy as np
from jax.experimental import pallas as pl
from jax.experimental.pallas import tpu as pltpu

FEATURE_DIM = 32
PRE_ARCH = [64, 16]
POST_ARCH = [64, 32]
TEMP = 0.5
BATCH = 8

LANES = 128
_H = PRE_ARCH[0]          # 64   pre/vf hidden width
_Z = PRE_ARCH[-1]         # 16   bottleneck / vf output width
_PH = POST_ARCH[0]        # 64   post hidden width
_PO = POST_ARCH[-1]       # 32   pi output width
_VF_OFF = _PO             # vf lives in output lanes [_PO, _PO + _Z)

# Packed weight-buffer row offsets (all multiples of 8).
_W0_OFF = 0                         # [FEATURE_DIM, 128]  fused (pre | vf) layer 0
_W1_OFF = _W0_OFF + FEATURE_DIM     # [128, 128]          fused block-diag layer 1
_W2_OFF = _W1_OFF + 2 * _H          # [_Z, 128]           post layer 0 (lane-padded)
_W3_OFF = _W2_OFF + _Z              # [128, 128]          post layer 1 (row/lane-padded)
_W_ROWS = _W3_OFF + LANES           # 304
_B_ROWS = 8


def _round_up(n, m):
    return ((n + m - 1) // m) * m


# --------------------------------------------------------------------------
# Kernel
# --------------------------------------------------------------------------
def bottleneck_kernel(x_ref, w_ref, b_ref, out_ref):
    x = x_ref[...]                                          # [TB, F]
    tb = x.shape[0]

    # ---- fused (pre | vf) first layer: one 128-lane-wide matmul + ReLU ----
    w0 = w_ref[_W0_OFF:_W0_OFF + FEATURE_DIM, :]            # [F, 128]
    h = jnp.maximum(
        jnp.dot(x, w0, preferred_element_type=jnp.float32) + b_ref[0:1, :], 0.0
    )                                                       # [TB, 128]  (pre | vf hidden)

    # ---- fused block-diagonal second layer (1/temp folded into pre half) ----
    w1 = w_ref[_W1_OFF:_W1_OFF + 2 * _H, :]                 # [128, 128]
    z = jnp.dot(h, w1, preferred_element_type=jnp.float32) + b_ref[1:2, :]
    z_pre = z[:, 0:_Z]                                      # [TB, 16] = pre_net(x)/temp
    # z lanes [_VF_OFF, _VF_OFF+_Z) hold vf_net(x); all other lanes are 0.

    # ---- softmax bottleneck over the 16-wide pre output ----
    m = jnp.max(z_pre, axis=-1, keepdims=True)
    e = jnp.exp(z_pre - m)
    p = e * pl.reciprocal(jnp.sum(e, axis=-1, keepdims=True), approx=False)

    # ---- post_net: Linear -> ReLU -> Linear -> ReLU (lane-padded weights keep
    #      the unused lanes exactly zero through both layers) ----
    w2 = w_ref[_W2_OFF:_W2_OFF + _Z, :]                     # [16, 128]
    g = jnp.maximum(
        jnp.dot(p, w2, preferred_element_type=jnp.float32) + b_ref[2:3, :], 0.0
    )                                                       # [TB, 128], lanes 64: == 0
    w3 = w_ref[_W3_OFF:_W3_OFF + LANES, :]                  # [128, 128]
    pi = jnp.maximum(
        jnp.dot(g, w3, preferred_element_type=jnp.float32) + b_ref[3:4, :], 0.0
    )                                                       # [TB, 128], lanes 32: == 0

    # ---- lane-dense packed output: pi in lanes [0,32), vf in lanes [32,48) ----
    lane = jax.lax.broadcasted_iota(jnp.int32, (tb, LANES), 1)
    vf_part = jnp.where((lane >= _VF_OFF) & (lane < _VF_OFF + _Z), z, 0.0)
    out_ref[...] = (pi + vf_part).astype(out_ref.dtype)


# --------------------------------------------------------------------------
# Host-side parameter fusion / packing (done once)
# --------------------------------------------------------------------------
def pack_params(params, temp=TEMP):
    """Fuse pre/vf nets, fold 1/temp, lane-pad, and pack everything into one
    [304,128] weight buffer and one [8,128] bias buffer (2 kernel inputs)."""
    f32 = jnp.float32
    inv_t = f32(1.0 / temp)

    # fused layer 0: [F, 2H] = [pre_w0 | vf_w0]
    w0 = jnp.concatenate([params["pre_w0"], params["vf_w0"]], axis=1)       # [32,128]
    b0 = jnp.concatenate([params["pre_b0"], params["vf_b0"]], axis=1)       # [1,128]

    # fused layer 1 (block diagonal; pre half scaled by 1/temp):
    #   rows 0:H   x lanes 0:Z              <- pre_w1 / temp
    #   rows H:2H  x lanes VF_OFF:VF_OFF+Z  <- vf_w1
    w1 = jnp.zeros((2 * _H, LANES), f32)
    w1 = w1.at[0:_H, 0:_Z].set(params["pre_w1"] * inv_t)
    w1 = w1.at[_H:2 * _H, _VF_OFF:_VF_OFF + _Z].set(params["vf_w1"])
    b1 = jnp.zeros((1, LANES), f32)
    b1 = b1.at[:, 0:_Z].set(params["pre_b1"] * inv_t)
    b1 = b1.at[:, _VF_OFF:_VF_OFF + _Z].set(params["vf_b1"])

    # post layer 0 (lane-padded to 128)
    w2 = jnp.zeros((_Z, LANES), f32).at[:, 0:_PH].set(params["post_w0"])
    b2 = jnp.zeros((1, LANES), f32).at[:, 0:_PH].set(params["post_b0"])

    # post layer 1 (row- and lane-padded to 128)
    w3 = jnp.zeros((LANES, LANES), f32).at[0:_PH, 0:_PO].set(params["post_w1"])
    b3 = jnp.zeros((1, LANES), f32).at[:, 0:_PO].set(params["post_b1"])

    w_buf = jnp.concatenate([w0, w1, w2, w3], axis=0)                        # [304,128]
    b_buf = jnp.concatenate(
        [b0, b1, b2, b3, jnp.zeros((_B_ROWS - 4, LANES), f32)], axis=0)      # [8,128]
    assert w_buf.shape == (_W_ROWS, LANES)
    assert b_buf.shape == (_B_ROWS, LANES)
    return w_buf, b_buf


# --------------------------------------------------------------------------
# Wrapper
# --------------------------------------------------------------------------
def bottleneck_extractor(features, packed, *, block_rows=256):
    """features: [B, FEATURE_DIM] f32; packed = pack_params(params).
    Returns (pi_x [B, POST_ARCH[-1]], vf_x [B, PRE_ARCH[-1]]).

    block_rows: batch-tile size (multiple of 8). 256 fills the v6e/v7x MXU;
    use 128 on v5e. The batch is zero-padded up to a tile multiple."""
    w_buf, b_buf = packed
    B = features.shape[0]
    assert features.shape[1] == FEATURE_DIM

    block_rows = max(8, _round_up(block_rows, 8))
    tb = min(block_rows, _round_up(B, 8))
    b_pad = _round_up(B, tb)
    if b_pad != B:
        features = jnp.pad(features, ((0, b_pad - B), (0, 0)))
    grid = (b_pad // tb,)

    out = pl.pallas_call(
        bottleneck_kernel,
        out_shape=jax.ShapeDtypeStruct((b_pad, LANES), jnp.float32),
        grid=grid,
        in_specs=[
            pl.BlockSpec((tb, FEATURE_DIM), lambda i: (i, 0)),
            pl.BlockSpec((_W_ROWS, LANES), lambda i: (0, 0)),   # VMEM-resident weights
            pl.BlockSpec((_B_ROWS, LANES), lambda i: (0, 0)),   # VMEM-resident biases
        ],
        out_specs=pl.BlockSpec((tb, LANES), lambda i: (i, 0)),
        compiler_params=pltpu.CompilerParams(
            dimension_semantics=("parallel",),   # shard batch tiles across TCs on v7x
        ),
    )(features, w_buf, b_buf)

    pi_x = out[:B, 0:_PO]
    vf_x = out[:B, _VF_OFF:_VF_OFF + _Z]
    return pi_x, vf_x


# --------------------------------------------------------------------------
# Parameter init + pure-JAX reference (mirrors the PyTorch forward())
# --------------------------------------------------------------------------
def init_params(key):
    """PyTorch-style uniform +-1/sqrt(fan_in) init.
    Weights stored [in, out]; biases stored [1, out]."""
    dims_pre = [FEATURE_DIM] + PRE_ARCH           # 32 -> 64 -> 16
    dims_post = [PRE_ARCH[-1]] + POST_ARCH        # 16 -> 64 -> 32

    params = {}
    names = (
        [("pre", i, dims_pre[i], dims_pre[i + 1]) for i in range(len(dims_pre) - 1)]
        + [("vf", i, dims_pre[i], dims_pre[i + 1]) for i in range(len(dims_pre) - 1)]
        + [("post", i, dims_post[i], dims_post[i + 1]) for i in range(len(dims_post) - 1)]
    )
    keys = jax.random.split(key, 2 * len(names))
    for n, (prefix, i, fan_in, fan_out) in enumerate(names):
        bound = 1.0 / np.sqrt(fan_in)
        w = jax.random.uniform(keys[2 * n], (fan_in, fan_out),
                               minval=-bound, maxval=bound, dtype=jnp.float32)
        b = jax.random.uniform(keys[2 * n + 1], (1, fan_out),
                               minval=-bound, maxval=bound, dtype=jnp.float32)
        params[f"{prefix}_w{i}"] = w
        params[f"{prefix}_b{i}"] = b
    return params


def reference_forward(features, params, temp=TEMP):
    def mlp(x, w0, b0, w1, b1, final_act):
        h = jnp.maximum(x @ w0 + b0, 0.0)
        y = h @ w1 + b1
        return jnp.maximum(y, 0.0) if final_act else y

    z = mlp(features, params["pre_w0"], params["pre_b0"],
            params["pre_w1"], params["pre_b1"], final_act=False)
    p = jax.nn.softmax(z / temp, axis=-1)
    pi = mlp(p, params["post_w0"], params["post_b0"],
             params["post_w1"], params["post_b1"], final_act=True)
    vf = mlp(features, params["vf_w0"], params["vf_b0"],
             params["vf_w1"], params["vf_b1"], final_act=False)
    return pi, vf


if __name__ == "__main__":
    key = jax.random.PRNGKey(0)
    k_params, k_x, k_x2 = jax.random.split(key, 3)
    params = init_params(k_params)
    packed = pack_params(params, temp=TEMP)

    # ---- small-shape check (single tile) ----
    features = jax.random.normal(k_x, (BATCH, FEATURE_DIM), dtype=jnp.float32)
    pi_x, vf_x = jax.block_until_ready(bottleneck_extractor(features, packed))
    pi_ref, vf_ref = reference_forward(features, params)
    np.testing.assert_allclose(np.asarray(pi_x), np.asarray(pi_ref), rtol=1e-5, atol=1e-5)
    np.testing.assert_allclose(np.asarray(vf_x), np.asarray(vf_ref), rtol=1e-5, atol=1e-5)
    assert pi_x.shape == (BATCH, POST_ARCH[-1])
    assert vf_x.shape == (BATCH, PRE_ARCH[-1])

    # ---- multi-tile / padded-batch check (exercises the batch grid) ----
    feats_big = jax.random.normal(k_x2, (260, FEATURE_DIM), dtype=jnp.float32)
    pi_b, vf_b = jax.block_until_ready(
        bottleneck_extractor(feats_big, packed, block_rows=128))
    pi_rb, vf_rb = reference_forward(feats_big, params)
    np.testing.assert_allclose(np.asarray(pi_b), np.asarray(pi_rb), rtol=1e-5, atol=1e-5)
    np.testing.assert_allclose(np.asarray(vf_b), np.asarray(vf_rb), rtol=1e-5, atol=1e-5)

    print("KERNEL_OK")
</pallas_src>

<mosaic_0001>
module attributes {stable_mosaic.version = 11 : i64} {
  func.func @bottleneck_kernel(%arg0: i32, %arg1: memref<8x32xf32, #tpu.memory_space<vmem>>, %arg2: memref<304x128xf32, #tpu.memory_space<vmem>>, %arg3: memref<8x128xf32, #tpu.memory_space<vmem>>, %arg4: memref<8x128xf32, #tpu.memory_space<vmem>>) attributes {dimension_semantics = [#tpu.dimension_semantics<parallel>], iteration_bounds = array<i64: 1>, scalar_prefetch = 0 : i64, scratch_operands = 0 : i64, tpu.core_type = #tpu.core_type<tc>, window_params = [{transform_indices = @transform_0, window_bounds = array<i64: 8, 32>}, {pipeline_mode = #tpu.pipeline_mode<synchronous>, transform_indices = @transform_1, window_bounds = array<i64: 304, 128>}, {pipeline_mode = #tpu.pipeline_mode<synchronous>, transform_indices = @transform_2, window_bounds = array<i64: 8, 128>}, {transform_indices = @transform_3, window_bounds = array<i64: 8, 128>}]} {
    %c0 = arith.constant 0 : index
    %c0_0 = arith.constant 0 : index
    %0 = vector.load %arg1[%c0, %c0_0] : memref<8x32xf32, #tpu.memory_space<vmem>>, vector<8x32xf32>
    %c0_1 = arith.constant 0 : index
    %c0_2 = arith.constant 0 : index
    %1 = vector.load %arg2[%c0_1, %c0_2] : memref<304x128xf32, #tpu.memory_space<vmem>>, vector<32x128xf32>
    %cst = arith.constant dense<0.000000e+00> : vector<8x128xf32>
    %2 = tpu.matmul %0, %1, %cst {dimension_numbers = #tpu.dot_dimension_numbers<[1], [0], [0], [1], [0, 0, 1, 1], [], []>} : vector<8x32xf32>, vector<32x128xf32>, vector<8x128xf32> -> vector<8x128xf32>
    %c0_3 = arith.constant 0 : index
    %c0_4 = arith.constant 0 : index
    %3 = vector.load %arg3[%c0_3, %c0_4] : memref<8x128xf32, #tpu.memory_space<vmem>>, vector<1x128xf32>
    %4 = vector.broadcast %3 : vector<1x128xf32> to vector<8x128xf32>
    %5 = arith.addf %2, %4 : vector<8x128xf32>
    %cst_5 = arith.constant 0.000000e+00 : f32
    %6 = vector.broadcast %cst_5 : f32 to vector<8x128xf32>
    %7 = arith.maximumf %5, %6 : vector<8x128xf32>
    %c32 = arith.constant 32 : index
    %c0_6 = arith.constant 0 : index
    %8 = vector.load %arg2[%c32, %c0_6] : memref<304x128xf32, #tpu.memory_space<vmem>>, vector<128x128xf32>
    %cst_7 = arith.constant dense<0.000000e+00> : vector<8x128xf32>
    %9 = tpu.matmul %7, %8, %cst_7 {dimension_numbers = #tpu.dot_dimension_numbers<[1], [0], [0], [1], [0, 0, 1, 1], [], []>} : vector<8x128xf32>, vector<128x128xf32>, vector<8x128xf32> -> vector<8x128xf32>
    %c1 = arith.constant 1 : index
    %c0_8 = arith.constant 0 : index
    %10 = vector.load %arg3[%c1, %c0_8] : memref<8x128xf32, #tpu.memory_space<vmem>>, vector<1x128xf32>
    %11 = vector.broadcast %10 : vector<1x128xf32> to vector<8x128xf32>
    %12 = arith.addf %9, %11 : vector<8x128xf32>
    %13 = vector.extract_strided_slice %12 {offsets = [0, 0], sizes = [8, 16], strides = [1, 1]} : vector<8x128xf32> to vector<8x16xf32>
    %cst_9 = arith.constant dense<0xFF800000> : vector<8xf32>
    %14 = vector.multi_reduction <maximumf>, %13, %cst_9 [1] : vector<8x16xf32> to vector<8xf32>
    %15 = vector.shape_cast %14 : vector<8xf32> to vector<8x1xf32>
    %16 = vector.broadcast %15 : vector<8x1xf32> to vector<8x16xf32>
    %17 = arith.subf %13, %16 : vector<8x16xf32>
    %18 = math.exp %17 : vector<8x16xf32>
    %cst_10 = arith.constant dense<0.000000e+00> : vector<8xf32>
    %19 = vector.multi_reduction <add>, %18, %cst_10 [1] : vector<8x16xf32> to vector<8xf32>
    %20 = vector.shape_cast %19 : vector<8xf32> to vector<8x1xf32>
    %21 = tpu.reciprocal %20 : vector<8x1xf32> -> vector<8x1xf32>
    %22 = vector.broadcast %21 : vector<8x1xf32> to vector<8x16xf32>
    %23 = arith.mulf %18, %22 : vector<8x16xf32>
    %c160 = arith.constant 160 : index
    %c0_11 = arith.constant 0 : index
    %24 = vector.load %arg2[%c160, %c0_11] : memref<304x128xf32, #tpu.memory_space<vmem>>, vector<16x128xf32>
    %cst_12 = arith.constant dense<0.000000e+00> : vector<8x128xf32>
    %25 = tpu.matmul %23, %24, %cst_12 {dimension_numbers = #tpu.dot_dimension_numbers<[1], [0], [0], [1], [0, 0, 1, 1], [], []>} : vector<8x16xf32>, vector<16x128xf32>, vector<8x128xf32> -> vector<8x128xf32>
    %c2 = arith.constant 2 : index
    %c0_13 = arith.constant 0 : index
    %26 = vector.load %arg3[%c2, %c0_13] : memref<8x128xf32, #tpu.memory_space<vmem>>, vector<1x128xf32>
    %27 = vector.broadcast %26 : vector<1x128xf32> to vector<8x128xf32>
    %28 = arith.addf %25, %27 : vector<8x128xf32>
    %cst_14 = arith.constant 0.000000e+00 : f32
    %29 = vector.broadcast %cst_14 : f32 to vector<8x128xf32>
    %30 = arith.maximumf %28, %29 : vector<8x128xf32>
    %c176 = arith.constant 176 : index
    %c0_15 = arith.constant 0 : index
    %31 = vector.load %arg2[%c176, %c0_15] : memref<304x128xf32, #tpu.memory_space<vmem>>, vector<128x128xf32>
    %cst_16 = arith.constant dense<0.000000e+00> : vector<8x128xf32>
    %32 = tpu.matmul %30, %31, %cst_16 {dimension_numbers = #tpu.dot_dimension_numbers<[1], [0], [0], [1], [0, 0, 1, 1], [], []>} : vector<8x128xf32>, vector<128x128xf32>, vector<8x128xf32> -> vector<8x128xf32>
    %c3 = arith.constant 3 : index
    %c0_17 = arith.constant 0 : index
    %33 = vector.load %arg3[%c3, %c0_17] : memref<8x128xf32, #tpu.memory_space<vmem>>, vector<1x128xf32>
    %34 = vector.broadcast %33 : vector<1x128xf32> to vector<8x128xf32>
    %35 = arith.addf %32, %34 : vector<8x128xf32>
    %cst_18 = arith.constant 0.000000e+00 : f32
    %36 = vector.broadcast %cst_18 : f32 to vector<8x128xf32>
    %37 = arith.maximumf %35, %36 : vector<8x128xf32>
    %38 = tpu.iota {dimensions = array<i32: 1>} : vector<8x128xi32>
    %c32_i32 = arith.constant 32 : i32
    %39 = vector.broadcast %c32_i32 : i32 to vector<8x128xi32>
    %40 = arith.cmpi sge, %38, %39 : vector<8x128xi32>
    %c48_i32 = arith.constant 48 : i32
    %41 = vector.broadcast %c48_i32 : i32 to vector<8x128xi32>
    %42 = arith.cmpi slt, %38, %41 : vector<8x128xi32>
    %43 = arith.andi %40, %42 : vector<8x128xi1>
    %cst_19 = arith.constant 0.000000e+00 : f32
    %44 = vector.broadcast %cst_19 : f32 to vector<8x128xf32>
    %45 = arith.select %43, %12, %44 : vector<8x128xi1>, vector<8x128xf32>
    %46 = arith.addf %37, %45 : vector<8x128xf32>
    %c0_20 = arith.constant 0 : index
    %c0_21 = arith.constant 0 : index
    %47 = vector.load %arg4[%c0_20, %c0_21] : memref<8x128xf32, #tpu.memory_space<vmem>>, vector<8x128xf32>
    tpu.vector_store %arg4[%c0_20, %c0_21], %46 {strides = array<i32>} : memref<8x128xf32, #tpu.memory_space<vmem>>, vector<8x128xf32>,
    return
  }
  func.func @transform_0(%arg0: i32) -> (i32, i32) {
    %c0_i32 = arith.constant 0 : i32
    %c0_i32_0 = arith.constant 0 : i32
    return %arg0, %c0_i32 : i32, i32
  }
  func.func @transform_1(%arg0: i32) -> (i32, i32) {
    %c0_i32 = arith.constant 0 : i32
    %c0_i32_0 = arith.constant 0 : i32
    %c0_i32_1 = arith.constant 0 : i32
    return %c0_i32, %c0_i32_0 : i32, i32
  }
  func.func @transform_2(%arg0: i32) -> (i32, i32) {
    %c0_i32 = arith.constant 0 : i32
    %c0_i32_0 = arith.constant 0 : i32
    %c0_i32_1 = arith.constant 0 : i32
    return %c0_i32, %c0_i32_0 : i32, i32
  }
  func.func @transform_3(%arg0: i32) -> (i32, i32) {
    %c0_i32 = arith.constant 0 : i32
    %c0_i32_0 = arith.constant 0 : i32
    return %arg0, %c0_i32 : i32, i32
  }
}

</mosaic_0001>

<llo_original>
// kernel: tpu_custom_call.1
$region0: #{tpu_custom_call.1}
  #allocation0 [shape = 'u32[]', space=smem, size = 0x4, offset = 0x4, fixed_abs, tag = 'smem constant byte address 0x4 - core index']
  #allocation1 [shape = 'u32[144,128]{1,0:T(1,128)}', space=vmem, size = 0x12000, scoped, tag = 'internal scratch']
  %s0 = inlined_call_operand.hbm [shape: f32[8,32], index: 0, kind: input, shape index: {}]
  %s1 = inlined_call_operand.hbm [shape: f32[304,128], index: 1, kind: input, shape index: {}]
  %s2 = inlined_call_operand.hbm [shape: f32[8,128], index: 2, kind: input, shape index: {}]
  %s3 = inlined_call_operand.hbm [shape: f32[8,128], index: 3, kind: output, shape index: {}]
  %s4 = sld [smem:[#allocation0]]
  $region34: #{tpu_custom_call.1} parent=0
    _
  %s6 = ssub.s32 1, %s4
  %s7 = scalar_select 0, %s6, %s4
  $region1: #{tpu_custom_call.1} parent=0
    #allocation2 [shape = 'u8[4096]{0}', space=vmem, size = 0x1000, scoped, tag = 'input window, operand 0, single buffered']
    #allocation3 [shape = 's32[1]{0}', space=sflag, size = 0x4, scoped, tag = 'scoped memory for tpu_custom_call.1']
    #allocation4 [shape = 's32[1]{0}', space=sflag, size = 0x4, scoped, tag = 'scoped memory for tpu_custom_call.1']
    #allocation5 [shape = 'u8[155648]{0}', space=vmem, size = 0x26000, scoped, tag = 'input window, operand 1, single buffered']
    #allocation6 [shape = 's32[1]{0}', space=sflag, size = 0x4, scoped, tag = 'scoped memory for tpu_custom_call.1']
    #allocation7 [shape = 'u8[4096]{0}', space=vmem, size = 0x1000, scoped, tag = 'input window, operand 2, single buffered']
    #allocation8 [shape = 'u8[4096]{0}', space=vmem, size = 0x1000, scoped, tag = 'output window, operand 0, single buffered']
    %8 = vsyncpa [#allocation3], 0
    %9 = vsyncpa [#allocation6], 0
    %10 = vsyncpa [#allocation4], 0
    // Predicated region
    $region2: #{tpu_custom_call.1} parent=1 // pred_check
      _
    $region3: #{tpu_custom_call.1} parent=1 // pred_check_branch
      %12 = sbr.rel (0) target = $region5
    $region4: #{tpu_custom_call.1} parent=1 // pred_region
      %s14 = ssub.s32 128, 128
      %15 = vsyncadd [#allocation3], %s14
      %s17 = sshll.u32 [#allocation2], 4
      %s18 = int_to_ptr.vmem [resolvable:$true] %s17
      %20 = dma.hbm_to_vmem [thread:$0]  %s0, 128, %s18, [#allocation3]
    $region5: #{tpu_custom_call.1} parent=1 // pred_fallthru
      _
    // Predicated region
    $region6: #{tpu_custom_call.1} parent=1 // pred_check
      _
    $region7: #{tpu_custom_call.1} parent=1 // pred_check_branch
      %22 = sbr.rel (0) target = $region9
    $region8: #{tpu_custom_call.1} parent=1 // pred_region
      %s24 = ssub.s32 4864, 4864
      %25 = vsyncadd [#allocation6], %s24
      %s26 = sshll.u32 [#allocation5], 4
      %s27 = int_to_ptr.vmem [resolvable:$true] %s26
      %32 = dma.hbm_to_vmem [thread:$0]  %s1, 4864, %s27, [#allocation6], 128, 128, 8
    $region9: #{tpu_custom_call.1} parent=1 // pred_fallthru
      _
    // Predicated region
    $region10: #{tpu_custom_call.1} parent=1 // pred_check
      _
    $region11: #{tpu_custom_call.1} parent=1 // pred_check_branch
      %34 = sbr.rel (0) target = $region13
    $region12: #{tpu_custom_call.1} parent=1 // pred_region
      %s36 = ssub.s32 128, 128
      %37 = vsyncadd [#allocation6], %s36
      %s39 = sshll.u32 [#allocation7], 4
      %s40 = int_to_ptr.vmem [resolvable:$true] %s39
      %42 = dma.hbm_to_vmem [thread:$0]  %s2, 128, %s40, [#allocation6]
    $region13: #{tpu_custom_call.1} parent=1 // pred_fallthru
      _
    // Predicated region
    $region14: #{tpu_custom_call.1} parent=1 // pred_check
      _
    $region15: #{tpu_custom_call.1} parent=1 // pred_check_branch
      %44 = sbr.rel (0) target = $region17
    $region16: #{tpu_custom_call.1} parent=1 // pred_region
      %45 = dma.done [#allocation3], 128
    $region17: #{tpu_custom_call.1} parent=1 // pred_fallthru
      _
    // Predicated region
    $region18: #{tpu_custom_call.1} parent=1 // pred_check
      _
    $region19: #{tpu_custom_call.1} parent=1 // pred_check_branch
      %47 = sbr.rel (0) target = $region21
    $region20: #{tpu_custom_call.1} parent=1 // pred_region
      %48 = dma.done [#allocation6], 4864
    $region21: #{tpu_custom_call.1} parent=1 // pred_fallthru
      _
    // Predicated region
    $region22: #{tpu_custom_call.1} parent=1 // pred_check
      _
    $region23: #{tpu_custom_call.1} parent=1 // pred_check_branch
      %50 = sbr.rel (0) target = $region25
    $region24: #{tpu_custom_call.1} parent=1 // pred_region
      %51 = dma.done [#allocation6], 128
    $region25: #{tpu_custom_call.1} parent=1 // pred_fallthru
      _
    %v52 = vld [vmem:[#allocation2] sm:$0xff]
    %v53 = vld [vmem:[#allocation5] sm:$0xff]
    %v54 = vld [vmem:[#allocation5 + $0x8] sm:$0xff]
    %v55 = vld [vmem:[#allocation5 + $0x10] sm:$0xff]
    %v56 = vld [vmem:[#allocation5 + $0x18] sm:$0xff]
    %v57 = vld [vmem:[#allocation7] sm:$0x1]
    %v58 = vlaneseq
    %v59 = vshrl.u32 %v58, 7
    %v60 = vsub.s32 0, %v59
    %v61 = vrot.slane %v57, %v60
    %vm62 = vcmask 261120
    %v64 = vsel %vm62, %v52, 0
    %66 = vmatprep.subr.mxu0 0.0
    %67 = vmatpush1.msra.mxu0 0.0
    %68 = vmatprep.subr.mxu0 0.0
    %69 = vmatpush1.msra.mxu0 0.0
    %70 = vmatprep.subr.mxu0 0.0
    %71 = vmatpush1.msra.mxu0 0.0
    %72 = vmatprep.subr.mxu0 0.0
    %73 = vmatpush1.msra.mxu0 0.0
    %74 = vmatprep.subr.mxu0 0.0
    %75 = vmatpush1.msra.mxu0 0.0
    %76 = vmatprep.subr.mxu0 0.0
    %77 = vmatpush1.msra.mxu0 0.0
    %78 = vmatprep.subr.mxu0 0.0
    %79 = vmatpush1.msra.mxu0 0.0
    %80 = vmatprep.subr.mxu0 0.0
    %81 = vmatpush1.msra.mxu0 0.0
    %82 = vmatprep.subr.mxu0 0.0
    %83 = vmatpush1.msra.mxu0 0.0
    %84 = vmatprep.subr.mxu0 0.0
    %85 = vmatpush1.msra.mxu0 0.0
    %86 = vmatprep.subr.mxu0 0.0
    %87 = vmatpush1.msra.mxu0 0.0
    %88 = vmatprep.subr.mxu0 0.0
    %89 = vmatpush1.msra.mxu0 0.0
    %90 = vmatprep.subr.mxu0 0.0
    %91 = vmatpush1.msra.mxu0 %v56
    %92 = vmatprep.subr.mxu0 0.0
    %93 = vmatpush1.msra.mxu0 %v55
    %94 = vmatprep.subr.mxu0 0.0
    %95 = vmatpush1.msra.mxu0 %v54
    %96 = vmatprep.subr.mxu0 0.0
    %97 = vmatpush1.msra.mxu0 %v53
    %98 = vmatprep.subr.mxu0 0.0
    %99 = vmatpush2.msra.mxu0 0.0
    %100 = vmatprep.subr.mxu0 0.0
    %101 = vmatpush2.msra.mxu0 0.0
    %102 = vmatprep.subr.mxu0 0.0
    %103 = vmatpush2.msra.mxu0 0.0
    %104 = vmatprep.subr.mxu0 0.0
    %105 = vmatpush2.msra.mxu0 0.0
    %106 = vmatprep.subr.mxu0 0.0
    %107 = vmatpush2.msra.mxu0 0.0
    %108 = vmatprep.subr.mxu0 0.0
    %109 = vmatpush2.msra.mxu0 0.0
    %110 = vmatprep.subr.mxu0 0.0
    %111 = vmatpush2.msra.mxu0 0.0
    %112 = vmatprep.subr.mxu0 0.0
    %113 = vmatpush2.msra.mxu0 0.0
    %114 = vmatprep.subr.mxu0 0.0
    %115 = vmatpush2.msra.mxu0 0.0
    %116 = vmatprep.subr.mxu0 0.0
    %117 = vmatpush2.msra.mxu0 0.0
    %118 = vmatprep.subr.mxu0 0.0
    %119 = vmatpush2.msra.mxu0 0.0
    %120 = vmatprep.subr.mxu0 0.0
    %121 = vmatpush2.msra.mxu0 0.0
    %122 = vmatprep.subr.mxu0 0.0
    %123 = vmatpush2.msra.mxu0 0.0
    %124 = vmatprep.subr.mxu0 0.0
    %125 = vmatpush2.msra.mxu0 0.0
    %126 = vmatprep.subr.mxu0 0.0
    %127 = vmatpush2.msra.mxu0 0.0
    %128 = vmatprep.subr.mxu0 0.0
    %129 = vmatpush2.msra.mxu0 0.0
    %130 = vmatprep.mubr.f32.mxu0 0.0
    %131 = vmatmul.mubr.f32.gmra.mxu0 %v64
    %v132 = vpop.f32.mrf.mxu0
    %v133 = vadd.f32 %v61, %v132
    %v134 = vpop.f32.mrf.mxu0
    %135 = vdwg.mxu0
    %v136 = vmax.f32 %v133, 0.0
    %v137 = vld [vmem:[#allocation5 + $0x20] sm:$0xff]
    %v138 = vld [vmem:[#allocation5 + $0x28] sm:$0xff]
    %v139 = vld [vmem:[#allocation5 + $0x30] sm:$0xff]
    %v140 = vld [vmem:[#allocation5 + $0x38] sm:$0xff]
    %v141 = vld [vmem:[#allocation5 + $0x40] sm:$0xff]
    %v142 = vld [vmem:[#allocation5 + $0x48] sm:$0xff]
    %v143 = vld [vmem:[#allocation5 + $0x50] sm:$0xff]
    %v144 = vld [vmem:[#allocation5 + $0x58] sm:$0xff]
    %v145 = vld [vmem:[#allocation5 + $0x60] sm:$0xff]
    %v146 = vld [vmem:[#allocation5 + $0x68] sm:$0xff]
    %v147 = vld [vmem:[#allocation5 + $0x70] sm:$0xff]
    %v148 = vld [vmem:[#allocation5 + $0x78] sm:$0xff]
    %v149 = vld [vmem:[#allocation5 + $0x80] sm:$0xff]
    %v150 = vld [vmem:[#allocation5 + $0x88] sm:$0xff]
    %v151 = vld [vmem:[#allocation5 + $0x90] sm:$0xff]
    %v152 = vld [vmem:[#allocation5 + $0x98] sm:$0xff]
    %v153 = vld [vmem:[#allocation7 + $0x1] sm:$0x1]
    %v154 = vlaneseq
    %v155 = vshrl.u32 %v154, 7
    %v156 = vsub.s32 0, %v155
    %v157 = vrot.slane %v153, %v156
    %158 = vmatprep.subr.mxu0 0.0
    %159 = vmatpush1.msra.mxu0 %v152
    %160 = vmatprep.subr.mxu0 0.0
    %161 = vmatpush1.msra.mxu0 %v151
    %162 = vmatprep.subr.mxu0 0.0
    %163 = vmatpush1.msra.mxu0 %v150
    %164 = vmatprep.subr.mxu0 0.0
    %165 = vmatpush1.msra.mxu0 %v149
    %166 = vmatprep.subr.mxu0 0.0
    %167 = vmatpush1.msra.mxu0 %v148
    %168 = vmatprep.subr.mxu0 0.0
    %169 = vmatpush1.msra.mxu0 %v147
    %170 = vmatprep.subr.mxu0 0.0
    %171 = vmatpush1.msra.mxu0 %v146
    %172 = vmatprep.subr.mxu0 0.0
    %173 = vmatpush1.msra.mxu0 %v145
    %174 = vmatprep.subr.mxu0 0.0
    %175 = vmatpush1.msra.mxu0 %v144
    %176 = vmatprep.subr.mxu0 0.0
    %177 = vmatpush1.msra.mxu0 %v143
    %178 = vmatprep.subr.mxu0 0.0
    %179 = vmatpush1.msra.mxu0 %v142
    %180 = vmatprep.subr.mxu0 0.0
    %181 = vmatpush1.msra.mxu0 %v141
    %182 = vmatprep.subr.mxu0 0.0
    %183 = vmatpush1.msra.mxu0 %v140
    %184 = vmatprep.subr.mxu0 0.0
    %185 = vmatpush1.msra.mxu0 %v139
    %186 = vmatprep.subr.mxu0 0.0
    %187 = vmatpush1.msra.mxu0 %v138
    %188 = vmatprep.subr.mxu0 0.0
    %189 = vmatpush1.msra.mxu0 %v137
    %190 = vmatprep.subr.mxu0 0.0
    %191 = vmatpush2.msra.mxu0 0.0
    %192 = vmatprep.subr.mxu0 0.0
    %193 = vmatpush2.msra.mxu0 0.0
    %194 = vmatprep.subr.mxu0 0.0
    %195 = vmatpush2.msra.mxu0 0.0
    %196 = vmatprep.subr.mxu0 0.0
    %197 = vmatpush2.msra.mxu0 0.0
    %198 = vmatprep.subr.mxu0 0.0
    %199 = vmatpush2.msra.mxu0 0.0
    %200 = vmatprep.subr.mxu0 0.0
    %201 = vmatpush2.msra.mxu0 0.0
    %202 = vmatprep.subr.mxu0 0.0
    %203 = vmatpush2.msra.mxu0 0.0
    %204 = vmatprep.subr.mxu0 0.0
    %205 = vmatpush2.msra.mxu0 0.0
    %206 = vmatprep.subr.mxu0 0.0
    %207 = vmatpush2.msra.mxu0 0.0
    %208 = vmatprep.subr.mxu0 0.0
    %209 = vmatpush2.msra.mxu0 0.0
    %210 = vmatprep.subr.mxu0 0.0
    %211 = vmatpush2.msra.mxu0 0.0
    %212 = vmatprep.subr.mxu0 0.0
    %213 = vmatpush2.msra.mxu0 0.0
    %214 = vmatprep.subr.mxu0 0.0
    %215 = vmatpush2.msra.mxu0 0.0
    %216 = vmatprep.subr.mxu0 0.0
    %217 = vmatpush2.msra.mxu0 0.0
    %218 = vmatprep.subr.mxu0 0.0
    %219 = vmatpush2.msra.mxu0 0.0
    %220 = vmatprep.subr.mxu0 0.0
    %221 = vmatpush2.msra.mxu0 0.0
    %222 = vmatprep.mubr.f32.mxu0 0.0
    %223 = vmatmul.mubr.f32.gmra.mxu0 %v136
    %v224 = vpop.f32.mrf.mxu0
    %v225 = vadd.f32 %v157, %v224
    %v226 = vpop.f32.mrf.mxu0
    %227 = vdwg.mxu0
    %vm228 = vcmask 130048
    %v229 = vsel %vm228, %v225, -inf
    %230 = vmax.xlane.f32.xlu0 %v229
    %v231 = vpop.xlane.xlu0 %230
    %v232 = vsub.f32 %v225, %v231
    %v233 = vmul.f32 %v232, 1.442695
    %v234 = vpow.pop %v233
    %v235 = vsel %vm228, %v234, 0.0
    %236 = vadd.xlane.f32.xlu0 %v235
    %v237 = vpop.xlane.xlu0 %236
    %v238 = vrcp.pop %v237
    %v239 = vmul.f32 %v234, %v238
    %v240 = vld [vmem:[#allocation5 + $0xa0] sm:$0xff]
    %v241 = vld [vmem:[#allocation5 + $0xa8] sm:$0xff]
    %v242 = vld [vmem:[#allocation7 + $0x2] sm:$0x1]
    %v243 = vlaneseq
    %v244 = vshrl.u32 %v243, 7
    %v245 = vsub.s32 0, %v244
    %v246 = vrot.slane %v242, %v245
    %v248 = vsel %vm228, %v239, 0
    %250 = vmatprep.subr.mxu0 0.0
    %251 = vmatpush1.msra.mxu0 0.0
    %252 = vmatprep.subr.mxu0 0.0
    %253 = vmatpush1.msra.mxu0 0.0
    %254 = vmatprep.subr.mxu0 0.0
    %255 = vmatpush1.msra.mxu0 0.0
    %256 = vmatprep.subr.mxu0 0.0
    %257 = vmatpush1.msra.mxu0 0.0
    %258 = vmatprep.subr.mxu0 0.0
    %259 = vmatpush1.msra.mxu0 0.0
    %260 = vmatprep.subr.mxu0 0.0
    %261 = vmatpush1.msra.mxu0 0.0
    %262 = vmatprep.subr.mxu0 0.0
    %263 = vmatpush1.msra.mxu0 0.0
    %264 = vmatprep.subr.mxu0 0.0
    %265 = vmatpush1.msra.mxu0 0.0
    %266 = vmatprep.subr.mxu0 0.0
    %267 = vmatpush1.msra.mxu0 0.0
    %268 = vmatprep.subr.mxu0 0.0
    %269 = vmatpush1.msra.mxu0 0.0
    %270 = vmatprep.subr.mxu0 0.0
    %271 = vmatpush1.msra.mxu0 0.0
    %272 = vmatprep.subr.mxu0 0.0
    %273 = vmatpush1.msra.mxu0 0.0
    %274 = vmatprep.subr.mxu0 0.0
    %275 = vmatpush1.msra.mxu0 0.0
    %276 = vmatprep.subr.mxu0 0.0
    %277 = vmatpush1.msra.mxu0 0.0
    %278 = vmatprep.subr.mxu0 0.0
    %279 = vmatpush1.msra.mxu0 %v241
    %280 = vmatprep.subr.mxu0 0.0
    %281 = vmatpush1.msra.mxu0 %v240
    %282 = vmatprep.subr.mxu0 0.0
    %283 = vmatpush2.msra.mxu0 0.0
    %284 = vmatprep.subr.mxu0 0.0
    %285 = vmatpush2.msra.mxu0 0.0
    %286 = vmatprep.subr.mxu0 0.0
    %287 = vmatpush2.msra.mxu0 0.0
    %288 = vmatprep.subr.mxu0 0.0
    %289 = vmatpush2.msra.mxu0 0.0
    %290 = vmatprep.subr.mxu0 0.0
    %291 = vmatpush2.msra.mxu0 0.0
    %292 = vmatprep.subr.mxu0 0.0
    %293 = vmatpush2.msra.mxu0 0.0
    %294 = vmatprep.subr.mxu0 0.0
    %295 = vmatpush2.msra.mxu0 0.0
    %296 = vmatprep.subr.mxu0 0.0
    %297 = vmatpush2.msra.mxu0 0.0
    %298 = vmatprep.subr.mxu0 0.0
    %299 = vmatpush2.msra.mxu0 0.0
    %300 = vmatprep.subr.mxu0 0.0
    %301 = vmatpush2.msra.mxu0 0.0
    %302 = vmatprep.subr.mxu0 0.0
    %303 = vmatpush2.msra.mxu0 0.0
    %304 = vmatprep.subr.mxu0 0.0
    %305 = vmatpush2.msra.mxu0 0.0
    %306 = vmatprep.subr.mxu0 0.0
    %307 = vmatpush2.msra.mxu0 0.0
    %308 = vmatprep.subr.mxu0 0.0
    %309 = vmatpush2.msra.mxu0 0.0
    %310 = vmatprep.subr.mxu0 0.0
    %311 = vmatpush2.msra.mxu0 0.0
    %312 = vmatprep.subr.mxu0 0.0
    %313 = vmatpush2.msra.mxu0 0.0
    %314 = vmatprep.mubr.f32.mxu0 0.0
    %315 = vmatmul.mubr.f32.gmra.mxu0 %v248
    %v316 = vpop.f32.mrf.mxu0
    %v317 = vadd.f32 %v246, %v316
    %v318 = vpop.f32.mrf.mxu0
    %319 = vdwg.mxu0
    %v320 = vmax.f32 %v317, 0.0
    %v321 = vld [vmem:[#allocation5 + $0xb0] sm:$0xff]
    %v322 = vld [vmem:[#allocation5 + $0xb8] sm:$0xff]
    %v323 = vld [vmem:[#allocation5 + $0xc0] sm:$0xff]
    %v324 = vld [vmem:[#allocation5 + $0xc8] sm:$0xff]
    %v325 = vld [vmem:[#allocation5 + $0xd0] sm:$0xff]
    %v326 = vld [vmem:[#allocation5 + $0xd8] sm:$0xff]
    %v327 = vld [vmem:[#allocation5 + $0xe0] sm:$0xff]
    %v328 = vld [vmem:[#allocation5 + $0xe8] sm:$0xff]
    %v329 = vld [vmem:[#allocation5 + $0xf0] sm:$0xff]
    %v330 = vld [vmem:[#allocation5 + $0xf8] sm:$0xff]
    %v331 = vld [vmem:[#allocation5 + $0x100] sm:$0xff]
    %v332 = vld [vmem:[#allocation5 + $0x108] sm:$0xff]
    %v333 = vld [vmem:[#allocation5 + $0x110] sm:$0xff]
    %v334 = vld [vmem:[#allocation5 + $0x118] sm:$0xff]
    %v335 = vld [vmem:[#allocation5 + $0x120] sm:$0xff]
    %v336 = vld [vmem:[#allocation5 + $0x128] sm:$0xff]
    %v337 = vld [vmem:[#allocation7 + $0x3] sm:$0x1]
    %v338 = vlaneseq
    %v339 = vshrl.u32 %v338, 7
    %v340 = vsub.s32 0, %v339
    %v341 = vrot.slane %v337, %v340
    %342 = vmatprep.subr.mxu0 0.0
    %343 = vmatpush1.msra.mxu0 %v336
    %344 = vmatprep.subr.mxu0 0.0
    %345 = vmatpush1.msra.mxu0 %v335
    %346 = vmatprep.subr.mxu0 0.0
    %347 = vmatpush1.msra.mxu0 %v334
    %348 = vmatprep.subr.mxu0 0.0
    %349 = vmatpush1.msra.mxu0 %v333
    %350 = vmatprep.subr.mxu0 0.0
    %351 = vmatpush1.msra.mxu0 %v332
    %352 = vmatprep.subr.mxu0 0.0
    %353 = vmatpush1.msra.mxu0 %v331
    %354 = vmatprep.subr.mxu0 0.0
    %355 = vmatpush1.msra.mxu0 %v330
    %356 = vmatprep.subr.mxu0 0.0
    %357 = vmatpush1.msra.mxu0 %v329
    %358 = vmatprep.subr.mxu0 0.0
    %359 = vmatpush1.msra.mxu0 %v328
    %360 = vmatprep.subr.mxu0 0.0
    %361 = vmatpush1.msra.mxu0 %v327
    %362 = vmatprep.subr.mxu0 0.0
    %363 = vmatpush1.msra.mxu0 %v326
    %364 = vmatprep.subr.mxu0 0.0
    %365 = vmatpush1.msra.mxu0 %v325
    %366 = vmatprep.subr.mxu0 0.0
    %367 = vmatpush1.msra.mxu0 %v324
    %368 = vmatprep.subr.mxu0 0.0
    %369 = vmatpush1.msra.mxu0 %v323
    %370 = vmatprep.subr.mxu0 0.0
    %371 = vmatpush1.msra.mxu0 %v322
    %372 = vmatprep.subr.mxu0 0.0
    %373 = vmatpush1.msra.mxu0 %v321
    %374 = vmatprep.subr.mxu0 0.0
    %375 = vmatpush2.msra.mxu0 0.0
    %376 = vmatprep.subr.mxu0 0.0
    %377 = vmatpush2.msra.mxu0 0.0
    %378 = vmatprep.subr.mxu0 0.0
    %379 = vmatpush2.msra.mxu0 0.0
    %380 = vmatprep.subr.mxu0 0.0
    %381 = vmatpush2.msra.mxu0 0.0
    %382 = vmatprep.subr.mxu0 0.0
    %383 = vmatpush2.msra.mxu0 0.0
    %384 = vmatprep.subr.mxu0 0.0
    %385 = vmatpush2.msra.mxu0 0.0
    %386 = vmatprep.subr.mxu0 0.0
    %387 = vmatpush2.msra.mxu0 0.0
    %388 = vmatprep.subr.mxu0 0.0
    %389 = vmatpush2.msra.mxu0 0.0
    %390 = vmatprep.subr.mxu0 0.0
    %391 = vmatpush2.msra.mxu0 0.0
    %392 = vmatprep.subr.mxu0 0.0
    %393 = vmatpush2.msra.mxu0 0.0
    %394 = vmatprep.subr.mxu0 0.0
    %395 = vmatpush2.msra.mxu0 0.0
    %396 = vmatprep.subr.mxu0 0.0
    %397 = vmatpush2.msra.mxu0 0.0
    %398 = vmatprep.subr.mxu0 0.0
    %399 = vmatpush2.msra.mxu0 0.0
    %400 = vmatprep.subr.mxu0 0.0
    %401 = vmatpush2.msra.mxu0 0.0
    %402 = vmatprep.subr.mxu0 0.0
    %403 = vmatpush2.msra.mxu0 0.0
    %404 = vmatprep.subr.mxu0 0.0
    %405 = vmatpush2.msra.mxu0 0.0
    %406 = vmatprep.mubr.f32.mxu0 0.0
    %407 = vmatmul.mubr.f32.gmra.mxu0 %v320
    %v408 = vpop.f32.mrf.mxu0
    %v409 = vadd.f32 %v341, %v408
    %v410 = vpop.f32.mrf.mxu0
    %411 = vdwg.mxu0
    %v412 = vmax.f32 %v409, 0.0
    %v413 = vlaneseq
    %v414 = vand.u32 %v413, 127
    %vm415 = vcmp.ge.s32.totalorder %v414, 32
    %vm416 = vcmp.lt.s32.totalorder %v414, 48
    %vm417 = vmand %vm415, %vm416
    %v418 = vsel %vm417, %v225, 0.0
    %v419 = vadd.f32 %v412, %v418
    %420 = vst [vmem:[#allocation8] sm:$0xff] %v419
    // Predicated region
    $region26: #{tpu_custom_call.1} parent=1 // pred_check
      _
    $region27: #{tpu_custom_call.1} parent=1 // pred_check_branch
      %422 = sbr.rel (0) target = $region29
    $region28: #{tpu_custom_call.1} parent=1 // pred_region
      %s424 = ssub.s32 128, 128
      %425 = vsyncadd [#allocation4], %s424
      %s427 = sshll.u32 [#allocation8], 4
      %s428 = int_to_ptr.vmem [resolvable:$true] %s427
      %430 = dma.vmem_to_hbm [thread:$0]  %s428, 128, %s3, [#allocation4]
    $region29: #{tpu_custom_call.1} parent=1 // pred_fallthru
      _
    // Predicated region
    $region30: #{tpu_custom_call.1} parent=1 // pred_check
      _
    $region31: #{tpu_custom_call.1} parent=1 // pred_check_branch
      %432 = sbr.rel (0) target = $region33
    $region32: #{tpu_custom_call.1} parent=1 // pred_region
      %433 = dma.done [#allocation4], 128
    $region33: #{tpu_custom_call.1} parent=1 // pred_fallthru
      _
    %434 = vsyncpa [#allocation3], 1
    %435 = vsyncpa [#allocation6], 1
    %436 = vsyncpa [#allocation4], 1

</llo_original>
